<compile_context>
chip_gen: v6e
topology: v6e:2x2x1
jax: 0.10.0
libtpu: 0.0.40
codegen_flags: <defaults>
</compile_context>

<pallas_src>
import math
import functools

import jax
import jax.numpy as jnp
from jax import lax
from jax.experimental import pallas as pl
from jax.experimental.pallas import tpu as pltpu


# ----------------------------------------------------------------------------
# Shared kernel helpers
# ----------------------------------------------------------------------------

def _project_kv(src_ref, wkv_ref, bkv_ref, d, kv_ref):
    """Fused (S, D) @ (D, 2D) K/V projection, once per batch element.
    Result is split into major-axis K / V planes of the bf16 scratch so the
    per-q-tile reads are clean (Sk, D) loads (no unused columns; the column
    split relayout happens only once per batch element)."""
    src_bf = src_ref[0].astype(jnp.bfloat16)
    kv = jnp.dot(src_bf, wkv_ref[...],
                 preferred_element_type=jnp.float32) + bkv_ref[...]   # (Sk, 2D) f32
    kv_ref[0] = kv[:, :d].astype(jnp.bfloat16)                        # K plane
    kv_ref[1] = kv[:, d:].astype(jnp.bfloat16)                        # V plane


def _project_q_and_attend(q_rows, wq_ref, bq_ref, kv_ref, out_ref, attn_ref):
    """Per-q-tile Q projection + attention core.  The 1/sqrt(d_k) scale is
    already folded into wq / bq in the wrapper."""
    q = (jnp.dot(q_rows.astype(jnp.bfloat16), wq_ref[...],
                 preferred_element_type=jnp.float32) + bq_ref[...])    # (tq, D) f32

    # (tq, Sk): contract last dims directly — MXU-native transposed operand.
    scores = lax.dot_general(q.astype(jnp.bfloat16), kv_ref[0],
                             (((1,), (1,)), ((), ())),
                             preferred_element_type=jnp.float32)

    # Numerically stable softmax along the key axis.  Exact reciprocal keeps
    # the user-visible attention-weight rows summing to 1 at f32 accuracy
    # (the divide sits on the EUP slot either way, so exactness is free).
    m = jnp.max(scores, axis=-1, keepdims=True)
    p = jnp.exp(scores - m)
    denom = jnp.sum(p, axis=-1, keepdims=True)                         # (tq, 1)
    weights = p * pl.reciprocal(denom, approx=False)                   # (tq, Sk)

    out = jnp.dot(weights.astype(jnp.bfloat16), kv_ref[1],
                  preferred_element_type=jnp.float32)                  # (tq, D)

    out_ref[0] = out.astype(out_ref.dtype)
    attn_ref[0] = weights.astype(attn_ref.dtype)


# ----------------------------------------------------------------------------
# Kernels
# ----------------------------------------------------------------------------

def _self_attn_kernel(x_ref, wq_ref, wkv_ref, bq_ref, bkv_ref,
                      out_ref, attn_ref, kv_ref, *, d_model, q_tile):
    """Self-attention (query is key is value): the activation is DMA'd once
    per batch element; fused K/V projection cached in bf16 scratch at the
    first q tile; Q rows sliced from the same resident block per tile."""
    qi = pl.program_id(1)

    @pl.when(qi == 0)
    def _():
        _project_kv(x_ref, wkv_ref, bkv_ref, d_model, kv_ref)

    row0 = pl.multiple_of(qi * q_tile, q_tile)
    q_rows = x_ref[0, pl.ds(row0, q_tile), :]
    _project_q_and_attend(q_rows, wq_ref, bq_ref, kv_ref, out_ref, attn_ref)


def _shared_kv_kernel(q_ref, kvsrc_ref, wq_ref, wkv_ref, bq_ref, bkv_ref,
                      out_ref, attn_ref, kv_ref, *, d_model):
    """Encoder-decoder style cross attention (key is value != query): fused
    (D, 2D) K/V projection once per batch element, query tiled along Sq."""
    @pl.when(pl.program_id(1) == 0)
    def _():
        _project_kv(kvsrc_ref, wkv_ref, bkv_ref, d_model, kv_ref)

    _project_q_and_attend(q_ref[0], wq_ref, bq_ref, kv_ref, out_ref, attn_ref)


def _cross_attn_kernel(q_ref, k_ref, v_ref, wq_ref, wk_ref, wv_ref,
                       bq_ref, bk_ref, bv_ref, out_ref, attn_ref, kv_ref):
    """Fully general path (query, key, value all distinct tensors): K and V
    projected once per batch element into bf16 scratch."""
    @pl.when(pl.program_id(1) == 0)
    def _():
        kv_ref[0] = (jnp.dot(k_ref[0].astype(jnp.bfloat16), wk_ref[...],
                             preferred_element_type=jnp.float32)
                     + bk_ref[...]).astype(jnp.bfloat16)
        kv_ref[1] = (jnp.dot(v_ref[0].astype(jnp.bfloat16), wv_ref[...],
                             preferred_element_type=jnp.float32)
                     + bv_ref[...]).astype(jnp.bfloat16)

    _project_q_and_attend(q_ref[0], wq_ref, bq_ref, kv_ref, out_ref, attn_ref)


# ----------------------------------------------------------------------------
# Wrapper
# ----------------------------------------------------------------------------

def _vmem_limit_bytes() -> int:
    """Generation-aware VMEM budget: ~7/8 of the physical per-core VMEM
    (≈56 MiB on v7x's 64 MiB, ≈112 MiB on v5e/v6e's 128 MiB), leaving headroom
    for Mosaic's internal scratch."""
    try:
        cap = int(pltpu.get_tpu_info().vmem_capacity_bytes)
    except Exception:
        cap = 64 * 1024 * 1024     # conservative fallback
    return cap * 7 // 8


def _pick_q_tile(sq, sk, d, vmem_budget, requested=None):
    """Largest q tile (multiple of 8, <=1024) that divides Sq and whose
    per-step VMEM footprint fits the byte budget.  Falls back to the full Sq
    (a block equal to the full dim is always legal)."""
    if requested is not None:
        if sq % requested != 0:
            raise ValueError(f"q_tile={requested} must divide seq_len_q={sq}")
        return requested
    # Bytes that do not scale with the q tile (conservative cross-path worst
    # case): double-buffered activation / key / value inputs, bf16 weights and
    # the (2, Sk, D) bf16 K/V scratch.
    fixed = (2 * sq * d + 4 * sk * d) * 4 + 2 * sk * d * 2 + 8 * d * d * 2

    def per_tile(t):
        return (2 * t * d * 4        # double-buffered output block
                + 2 * t * sk * 4     # double-buffered attention-weights block
                + 3 * t * sk * 4     # in-kernel scores / exp / weights live set
                + 2 * t * d * 4)     # q tile input + projected Q

    candidates = [t for t in range(8, min(sq, 1024) + 1, 8) if sq % t == 0]
    if not candidates:
        return sq
    fitting = [t for t in candidates if fixed + per_tile(t) <= vmem_budget]
    return max(fitting) if fitting else min(candidates)


def _const_spec(shape):
    """Grid-invariant operand: constant index map, single-buffered (no dead
    second VMEM copy for blocks whose index never changes)."""
    return pl.BlockSpec(shape, lambda b, q: (0,) * len(shape),
                        pipeline_mode=pl.Buffered(1))


def single_head_attention(query, key, value, params, *, q_tile=None):
    """query: (B, Sq, D); key/value: (B, Sk, D).  params hold PyTorch-style
    nn.Linear weights (out, in) and biases.  Returns (output, attention_weights)
    with shapes (B, Sq, D) and (B, Sq, Sk) — mask=None path of the module.

    Dispatch (by object identity, mirroring how the module is typically used):
      * query is key is value  -> self-attention fast path
      * key is value           -> shared-K/V cross-attention path
      * otherwise              -> fully general path
    """
    B, Sq, D = query.shape
    Bk, Sk, Dk = key.shape
    if Bk != B or key.shape[0] != value.shape[0]:
        raise ValueError("Query, key, and value must have the same batch size")
    if Dk != D or value.shape[-1] != D:
        raise ValueError("Input tensors must have last dimension equal to d_model")
    if value.shape[1] != Sk:
        raise ValueError("Key and value must have the same sequence length")

    f32, bf16 = jnp.float32, jnp.bfloat16
    scale = 1.0 / math.sqrt(D)
    # nn.Linear stores (out, in); transpose once so kernels compute x @ W + b.
    # The 1/sqrt(d_k) score scale is folded into Wq / bq.  Weights go to bf16
    # so both MXU operands run at native rate; accumulation stays f32.
    wq = (params["w_q_weight"].astype(f32).T * scale).astype(bf16)
    bq = (params["w_q_bias"].astype(f32) * scale).reshape(1, D)
    wk = params["w_k_weight"].astype(f32).T.astype(bf16)
    bk = params["w_k_bias"].astype(f32).reshape(1, D)
    wv = params["w_v_weight"].astype(f32).T.astype(bf16)
    bv = params["w_v_bias"].astype(f32).reshape(1, D)

    vmem_limit = _vmem_limit_bytes()
    tq = _pick_q_tile(Sq, Sk, D, vmem_limit, requested=q_tile)
    n_q = Sq // tq

    out_shape = (jax.ShapeDtypeStruct((B, Sq, D), query.dtype),
                 jax.ShapeDtypeStruct((B, Sq, Sk), jnp.float32))
    out_specs = [pl.BlockSpec((1, tq, D), lambda b, q: (b, q, 0)),
                 pl.BlockSpec((1, tq, Sk), lambda b, q: (b, q, 0))]
    compiler_params = pltpu.CompilerParams(
        dimension_semantics=("parallel", "arbitrary"),
        vmem_limit_bytes=vmem_limit)
    kv_scratch = pltpu.VMEM((2, Sk, D), jnp.bfloat16)   # K / V planes, bf16

    if key is value:
        w_kv = jnp.concatenate([wk, wv], axis=1)        # (D, 2D) bf16
        b_kv = jnp.concatenate([bk, bv], axis=1)        # (1, 2D) f32
        weight_specs = [_const_spec((D, D)), _const_spec((D, 2 * D)),
                        _const_spec((1, D)), _const_spec((1, 2 * D))]
        if query is key:
            # Self-attention: full activation fetched once per batch element
            # (block index invariant along q); Q rows sliced per tile.
            kernel = functools.partial(_self_attn_kernel, d_model=D, q_tile=tq)
            in_specs = ([pl.BlockSpec((1, Sq, D), lambda b, q: (b, 0, 0))]
                        + weight_specs)
            operands = (query, wq, w_kv, bq, b_kv)
        else:
            kernel = functools.partial(_shared_kv_kernel, d_model=D)
            in_specs = ([pl.BlockSpec((1, tq, D), lambda b, q: (b, q, 0)),
                         pl.BlockSpec((1, Sk, D), lambda b, q: (b, 0, 0))]
                        + weight_specs)
            operands = (query, key, wq, w_kv, bq, b_kv)
        return pl.pallas_call(
            kernel,
            out_shape=out_shape,
            grid_spec=pltpu.PrefetchScalarGridSpec(
                num_scalar_prefetch=0, grid=(B, n_q),
                in_specs=in_specs, out_specs=out_specs,
                scratch_shapes=[kv_scratch]),
            compiler_params=compiler_params,
        )(*operands)

    # Fully general path: query, key, value all distinct tensors.
    in_specs = [
        pl.BlockSpec((1, tq, D), lambda b, q: (b, q, 0)),    # query tile
        pl.BlockSpec((1, Sk, D), lambda b, q: (b, 0, 0)),    # key, per batch
        pl.BlockSpec((1, Sk, D), lambda b, q: (b, 0, 0)),    # value, per batch
        _const_spec((D, D)), _const_spec((D, D)), _const_spec((D, D)),
        _const_spec((1, D)), _const_spec((1, D)), _const_spec((1, D)),
    ]
    return pl.pallas_call(
        _cross_attn_kernel,
        out_shape=out_shape,
        grid_spec=pltpu.PrefetchScalarGridSpec(
            num_scalar_prefetch=0, grid=(B, n_q),
            in_specs=in_specs, out_specs=out_specs,
            scratch_shapes=[kv_scratch]),
        compiler_params=compiler_params,
    )(query, key, value, wq, wk, wv, bq, bk, bv)


# ----------------------------------------------------------------------------
# Reference + self-test
# ----------------------------------------------------------------------------

def _reference(query, key, value, params):
    """Pure-JAX f32 reference mirroring the PyTorch forward (mask=None)."""
    D = query.shape[-1]
    Q = query @ params["w_q_weight"].T + params["w_q_bias"]
    K = key @ params["w_k_weight"].T + params["w_k_bias"]
    V = value @ params["w_v_weight"].T + params["w_v_bias"]
    scores = jnp.einsum("bqd,bkd->bqk", Q, K) / math.sqrt(D)
    w = jax.nn.softmax(scores, axis=-1)
    return jnp.einsum("bqk,bkd->bqd", w, V), w


if __name__ == "__main__":
    B, S, D = 2, 8, 32
    Sk = 16
    root = jax.random.PRNGKey(0)
    kx, kq, kk, kv, kbq, kbk, kbv, kck, kcv = jax.random.split(root, 9)

    x = jax.random.normal(kx, (B, S, D), dtype=jnp.float32)

    bound = 1.0 / math.sqrt(D)   # PyTorch nn.Linear default init range
    params = {
        "w_q_weight": jax.random.uniform(kq, (D, D), jnp.float32, -bound, bound),
        "w_k_weight": jax.random.uniform(kk, (D, D), jnp.float32, -bound, bound),
        "w_v_weight": jax.random.uniform(kv, (D, D), jnp.float32, -bound, bound),
        "w_q_bias": jax.random.uniform(kbq, (D,), jnp.float32, -bound, bound),
        "w_k_bias": jax.random.uniform(kbk, (D,), jnp.float32, -bound, bound),
        "w_v_bias": jax.random.uniform(kbv, (D,), jnp.float32, -bound, bound),
    }

    # bf16 MXU operands vs. the pure-f32 reference -> ~1e-2-level deviation is
    # expected; softmax normalization itself remains f32-exact (rows sum to 1).
    TOL = dict(atol=2e-2, rtol=2e-2)

    def check(out, attn, ref_out, ref_attn):
        assert out.shape == ref_out.shape and attn.shape == ref_attn.shape
        assert jnp.allclose(out, ref_out, **TOL), \
            float(jnp.max(jnp.abs(out - ref_out)))
        assert jnp.allclose(attn, ref_attn, **TOL), \
            float(jnp.max(jnp.abs(attn - ref_attn)))
        assert jnp.allclose(jnp.sum(attn, axis=-1), 1.0, atol=1e-5)

    # 1) self-attention path (query is key is value)
    out, attn = single_head_attention(x, x, x, params)
    jax.block_until_ready((out, attn))
    assert out.shape == (B, S, D) and attn.shape == (B, S, S)
    check(out, attn, *_reference(x, x, x, params))

    # 2) encoder-decoder cross attention (key is value, != query, Sk != Sq)
    mem = jax.random.normal(kck, (B, Sk, D), dtype=jnp.float32)
    out2, attn2 = single_head_attention(x, mem, mem, params)
    jax.block_until_ready((out2, attn2))
    assert out2.shape == (B, S, D) and attn2.shape == (B, S, Sk)
    check(out2, attn2, *_reference(x, mem, mem, params))

    # 3) fully general path (distinct key / value tensors)
    v_in = jax.random.normal(kcv, (B, Sk, D), dtype=jnp.float32)
    out3, attn3 = single_head_attention(x, mem, v_in, params)
    jax.block_until_ready((out3, attn3))
    assert out3.shape == (B, S, D) and attn3.shape == (B, S, Sk)
    check(out3, attn3, *_reference(x, mem, v_in, params))

    print("KERNEL_OK")
</pallas_src>

<mosaic_0001>
module attributes {stable_mosaic.version = 11 : i64} {
  func.func @_self_attn_kernel(%arg0: i32, %arg1: i32, %arg2: memref<1x8x32xf32, #tpu.memory_space<vmem>>, %arg3: memref<32x32xbf16, #tpu.memory_space<vmem>>, %arg4: memref<32x64xbf16, #tpu.memory_space<vmem>>, %arg5: memref<1x32xf32, #tpu.memory_space<vmem>>, %arg6: memref<1x64xf32, #tpu.memory_space<vmem>>, %arg7: memref<1x8x32xf32, #tpu.memory_space<vmem>>, %arg8: memref<1x8x8xf32, #tpu.memory_space<vmem>>, %arg9: memref<2x8x32xbf16, #tpu.memory_space<vmem>>) attributes {dimension_semantics = [#tpu.dimension_semantics<parallel>, #tpu.dimension_semantics<arbitrary>], iteration_bounds = array<i64: 2, 1>, scalar_prefetch = 0 : i64, scratch_operands = 1 : i64, tpu.core_type = #tpu.core_type<tc>, window_params = [{transform_indices = @transform_0, window_bounds = array<i64: 1, 8, 32>}, {pipeline_mode = #tpu.pipeline_mode<synchronous>, transform_indices = @transform_1, window_bounds = array<i64: 32, 32>}, {pipeline_mode = #tpu.pipeline_mode<synchronous>, transform_indices = @transform_2, window_bounds = array<i64: 32, 64>}, {pipeline_mode = #tpu.pipeline_mode<synchronous>, transform_indices = @transform_3, window_bounds = array<i64: 1, 32>}, {pipeline_mode = #tpu.pipeline_mode<synchronous>, transform_indices = @transform_4, window_bounds = array<i64: 1, 64>}, {transform_indices = @transform_5, window_bounds = array<i64: 1, 8, 32>}, {transform_indices = @transform_6, window_bounds = array<i64: 1, 8, 8>}]} {
    %c0_i32 = arith.constant 0 : i32
    %0 = arith.cmpi eq, %arg1, %c0_i32 : i32
    %1 = arith.extui %0 : i1 to i32
    %c0_i32_0 = arith.constant 0 : i32
    %2 = arith.cmpi ne, %1, %c0_i32_0 : i32
    scf.if %2 {
      %c0_21 = arith.constant 0 : index
      %c0_22 = arith.constant 0 : index
      %c0_23 = arith.constant 0 : index
      %38 = vector.load %arg2[%c0_21, %c0_22, %c0_23] : memref<1x8x32xf32, #tpu.memory_space<vmem>>, vector<1x8x32xf32>
      %39 = vector.shape_cast %38 : vector<1x8x32xf32> to vector<8x32xf32>
      %40 = arith.truncf %39 : vector<8x32xf32> to vector<8x32xbf16>
      %c0_24 = arith.constant 0 : index
      %c0_25 = arith.constant 0 : index
      %41 = vector.load %arg4[%c0_24, %c0_25] : memref<32x64xbf16, #tpu.memory_space<vmem>>, vector<32x64xbf16>
      %cst_26 = arith.constant dense<0.000000e+00> : vector<8x64xf32>
      %42 = tpu.matmul %40, %41, %cst_26 {dimension_numbers = #tpu.dot_dimension_numbers<[1], [0], [0], [1], [0, 0, 1, 1], [], []>} : vector<8x32xbf16>, vector<32x64xbf16>, vector<8x64xf32> -> vector<8x64xf32>
      %c0_27 = arith.constant 0 : index
      %c0_28 = arith.constant 0 : index
      %43 = vector.load %arg6[%c0_27, %c0_28] : memref<1x64xf32, #tpu.memory_space<vmem>>, vector<1x64xf32>
      %44 = vector.broadcast %43 : vector<1x64xf32> to vector<8x64xf32>
      %45 = arith.addf %42, %44 : vector<8x64xf32>
      %46 = vector.extract_strided_slice %45 {offsets = [0, 0], sizes = [8, 32], strides = [1, 1]} : vector<8x64xf32> to vector<8x32xf32>
      %47 = arith.truncf %46 : vector<8x32xf32> to vector<8x32xbf16>
      %c0_29 = arith.constant 0 : index
      %c0_30 = arith.constant 0 : index
      %c0_31 = arith.constant 0 : index
      %48 = vector.load %arg9[%c0_29, %c0_30, %c0_31] : memref<2x8x32xbf16, #tpu.memory_space<vmem>>, vector<1x8x32xbf16>
      %49 = vector.shape_cast %48 : vector<1x8x32xbf16> to vector<8x32xbf16>
      %50 = vector.shape_cast %47 : vector<8x32xbf16> to vector<1x8x32xbf16>
      tpu.vector_store %arg9[%c0_29, %c0_30, %c0_31], %50 {strides = array<i32>} : memref<2x8x32xbf16, #tpu.memory_space<vmem>>, vector<1x8x32xbf16>,
      %51 = vector.extract_strided_slice %45 {offsets = [0, 32], sizes = [8, 32], strides = [1, 1]} : vector<8x64xf32> to vector<8x32xf32>
      %52 = arith.truncf %51 : vector<8x32xf32> to vector<8x32xbf16>
      %c1_32 = arith.constant 1 : index
      %c0_33 = arith.constant 0 : index
      %c0_34 = arith.constant 0 : index
      %53 = vector.load %arg9[%c1_32, %c0_33, %c0_34] : memref<2x8x32xbf16, #tpu.memory_space<vmem>>, vector<1x8x32xbf16>
      %54 = vector.shape_cast %53 : vector<1x8x32xbf16> to vector<8x32xbf16>
      %55 = vector.shape_cast %52 : vector<8x32xbf16> to vector<1x8x32xbf16>
      tpu.vector_store %arg9[%c1_32, %c0_33, %c0_34], %55 {strides = array<i32>} : memref<2x8x32xbf16, #tpu.memory_space<vmem>>, vector<1x8x32xbf16>,
    } else {
    }
    %c8_i32 = arith.constant 8 : i32
    %3 = arith.muli %arg1, %c8_i32 : i32
    %4 = tpu.assume_multiple %3, 8 : i32
    %c0 = arith.constant 0 : index
    %5 = arith.index_cast %4 : i32 to index
    %c0_1 = arith.constant 0 : index
    %6 = vector.load %arg2[%c0, %5, %c0_1] : memref<1x8x32xf32, #tpu.memory_space<vmem>>, vector<1x8x32xf32>
    %7 = vector.shape_cast %6 : vector<1x8x32xf32> to vector<8x32xf32>
    %8 = arith.truncf %7 : vector<8x32xf32> to vector<8x32xbf16>
    %c0_2 = arith.constant 0 : index
    %c0_3 = arith.constant 0 : index
    %9 = vector.load %arg3[%c0_2, %c0_3] : memref<32x32xbf16, #tpu.memory_space<vmem>>, vector<32x32xbf16>
    %cst = arith.constant dense<0.000000e+00> : vector<8x32xf32>
    %10 = tpu.matmul %8, %9, %cst {dimension_numbers = #tpu.dot_dimension_numbers<[1], [0], [0], [1], [0, 0, 1, 1], [], []>} : vector<8x32xbf16>, vector<32x32xbf16>, vector<8x32xf32> -> vector<8x32xf32>
    %c0_4 = arith.constant 0 : index
    %c0_5 = arith.constant 0 : index
    %11 = vector.load %arg5[%c0_4, %c0_5] : memref<1x32xf32, #tpu.memory_space<vmem>>, vector<1x32xf32>
    %12 = vector.broadcast %11 : vector<1x32xf32> to vector<8x32xf32>
    %13 = arith.addf %10, %12 : vector<8x32xf32>
    %14 = arith.truncf %13 : vector<8x32xf32> to vector<8x32xbf16>
    %c0_6 = arith.constant 0 : index
    %c0_7 = arith.constant 0 : index
    %c0_8 = arith.constant 0 : index
    %15 = vector.load %arg9[%c0_6, %c0_7, %c0_8] : memref<2x8x32xbf16, #tpu.memory_space<vmem>>, vector<1x8x32xbf16>
    %16 = vector.shape_cast %15 : vector<1x8x32xbf16> to vector<8x32xbf16>
    %cst_9 = arith.constant dense<0.000000e+00> : vector<8x8xf32>
    %17 = tpu.matmul %14, %16, %cst_9 {dimension_numbers = #tpu.dot_dimension_numbers<[1], [1], [0], [0], [0, 0, 1, 0], [], []>} : vector<8x32xbf16>, vector<8x32xbf16>, vector<8x8xf32> -> vector<8x8xf32>
    %cst_10 = arith.constant dense<0xFF800000> : vector<8xf32>
    %18 = vector.multi_reduction <maximumf>, %17, %cst_10 [1] : vector<8x8xf32> to vector<8xf32>
    %19 = vector.shape_cast %18 : vector<8xf32> to vector<8x1xf32>
    %20 = vector.broadcast %19 : vector<8x1xf32> to vector<8x8xf32>
    %21 = arith.subf %17, %20 : vector<8x8xf32>
    %22 = math.exp %21 : vector<8x8xf32>
    %cst_11 = arith.constant dense<0.000000e+00> : vector<8xf32>
    %23 = vector.multi_reduction <add>, %22, %cst_11 [1] : vector<8x8xf32> to vector<8xf32>
    %24 = vector.shape_cast %23 : vector<8xf32> to vector<8x1xf32>
    %25 = tpu.reciprocal %24 : vector<8x1xf32> -> vector<8x1xf32>
    %26 = vector.broadcast %25 : vector<8x1xf32> to vector<8x8xf32>
    %27 = arith.mulf %22, %26 : vector<8x8xf32>
    %28 = arith.truncf %27 : vector<8x8xf32> to vector<8x8xbf16>
    %c1 = arith.constant 1 : index
    %c0_12 = arith.constant 0 : index
    %c0_13 = arith.constant 0 : index
    %29 = vector.load %arg9[%c1, %c0_12, %c0_13] : memref<2x8x32xbf16, #tpu.memory_space<vmem>>, vector<1x8x32xbf16>
    %30 = vector.shape_cast %29 : vector<1x8x32xbf16> to vector<8x32xbf16>
    %cst_14 = arith.constant dense<0.000000e+00> : vector<8x32xf32>
    %31 = tpu.matmul %28, %30, %cst_14 {dimension_numbers = #tpu.dot_dimension_numbers<[1], [0], [0], [1], [0, 0, 1, 1], [], []>} : vector<8x8xbf16>, vector<8x32xbf16>, vector<8x32xf32> -> vector<8x32xf32>
    %c0_15 = arith.constant 0 : index
    %c0_16 = arith.constant 0 : index
    %c0_17 = arith.constant 0 : index
    %32 = vector.load %arg7[%c0_15, %c0_16, %c0_17] : memref<1x8x32xf32, #tpu.memory_space<vmem>>, vector<1x8x32xf32>
    %33 = vector.shape_cast %32 : vector<1x8x32xf32> to vector<8x32xf32>
    %34 = vector.shape_cast %31 : vector<8x32xf32> to vector<1x8x32xf32>
    tpu.vector_store %arg7[%c0_15, %c0_16, %c0_17], %34 {strides = array<i32>} : memref<1x8x32xf32, #tpu.memory_space<vmem>>, vector<1x8x32xf32>,
    %c0_18 = arith.constant 0 : index
    %c0_19 = arith.constant 0 : index
    %c0_20 = arith.constant 0 : index
    %35 = vector.load %arg8[%c0_18, %c0_19, %c0_20] : memref<1x8x8xf32, #tpu.memory_space<vmem>>, vector<1x8x8xf32>
    %36 = vector.shape_cast %35 : vector<1x8x8xf32> to vector<8x8xf32>
    %37 = vector.shape_cast %27 : vector<8x8xf32> to vector<1x8x8xf32>
    tpu.vector_store %arg8[%c0_18, %c0_19, %c0_20], %37 {strides = array<i32>} : memref<1x8x8xf32, #tpu.memory_space<vmem>>, vector<1x8x8xf32>,
    return
  }
  func.func @transform_0(%arg0: i32, %arg1: i32) -> (i32, i32, i32) {
    %c0_i32 = arith.constant 0 : i32
    %c0_i32_0 = arith.constant 0 : i32
    %c0_i32_1 = arith.constant 0 : i32
    return %arg0, %c0_i32, %c0_i32_0 : i32, i32, i32
  }
  func.func @transform_1(%arg0: i32, %arg1: i32) -> (i32, i32) {
    %c0_i32 = arith.constant 0 : i32
    %c0_i32_0 = arith.constant 0 : i32
    %c0_i32_1 = arith.constant 0 : i32
    return %c0_i32, %c0_i32_0 : i32, i32
  }
  func.func @transform_2(%arg0: i32, %arg1: i32) -> (i32, i32) {
    %c0_i32 = arith.constant 0 : i32
    %c0_i32_0 = arith.constant 0 : i32
    %c0_i32_1 = arith.constant 0 : i32
    return %c0_i32, %c0_i32_0 : i32, i32
  }
  func.func @transform_3(%arg0: i32, %arg1: i32) -> (i32, i32) {
    %c0_i32 = arith.constant 0 : i32
    %c0_i32_0 = arith.constant 0 : i32
    %c0_i32_1 = arith.constant 0 : i32
    return %c0_i32, %c0_i32_0 : i32, i32
  }
  func.func @transform_4(%arg0: i32, %arg1: i32) -> (i32, i32) {
    %c0_i32 = arith.constant 0 : i32
    %c0_i32_0 = arith.constant 0 : i32
    %c0_i32_1 = arith.constant 0 : i32
    return %c0_i32, %c0_i32_0 : i32, i32
  }
  func.func @transform_5(%arg0: i32, %arg1: i32) -> (i32, i32, i32) {
    %c0_i32 = arith.constant 0 : i32
    %c0_i32_0 = arith.constant 0 : i32
    return %arg0, %arg1, %c0_i32 : i32, i32, i32
  }
  func.func @transform_6(%arg0: i32, %arg1: i32) -> (i32, i32, i32) {
    %c0_i32 = arith.constant 0 : i32
    %c0_i32_0 = arith.constant 0 : i32
    return %arg0, %arg1, %c0_i32 : i32, i32, i32
  }
}

</mosaic_0001>

<llo_original>
// kernel: tpu_custom_call.1
$region0: #{tpu_custom_call.1}
  #allocation0 [shape = 'u32[]', space=smem, size = 0x4, offset = 0x4, fixed_abs, tag = 'smem constant byte address 0x4 - core index']
  #allocation1 [shape = 'u32[144,128]{1,0:T(1,128)}', space=vmem, size = 0x12000, scoped, tag = 'internal scratch']
  #allocation2 [shape = 'bf16[2,8,32]{2,1,0:T(8,128)(2,1)}', space=vmem, size = 0x1000, scoped, tag = 'scratch operand']
  %s0 = inlined_call_operand.hbm [shape: f32[2,8,32], index: 0, kind: input, shape index: {}]
  %s1 = inlined_call_operand.hbm [shape: bf16[32,32], index: 1, kind: input, shape index: {}]
  %s2 = inlined_call_operand.hbm [shape: bf16[32,64], index: 2, kind: input, shape index: {}]
  %s3 = inlined_call_operand.vmem [shape: f32[1,32], index: 3, kind: input, shape index: {}]
  %s4 = inlined_call_operand.vmem [shape: f32[1,64], index: 4, kind: input, shape index: {}]
  %s5 = inlined_call_operand.hbm [shape: f32[2,8,32], index: 5, kind: output, shape index: {0}]
  %s6 = inlined_call_operand.hbm [shape: f32[2,8,8], index: 6, kind: output, shape index: {1}]
  %7 = xla_tuple %s5, %s6
  %s8 = sld [smem:[#allocation0]]
  $region77: #{tpu_custom_call.1} parent=0
    _
  %s10 = ssub.s32 1, %s8
  %s11 = scalar_select 0, %s10, %s8
  $region1: #{tpu_custom_call.1} parent=0
    #allocation3 [shape = 'u8[8192]{0}', space=vmem, size = 0x2000, scoped, tag = 'input window, operand 0']
    #allocation4 [shape = 's32[2]{0}', space=sflag, size = 0x8, scoped, tag = 'scoped memory for tpu_custom_call.1']
    #allocation5 [shape = 's32[2]{0}', space=sflag, size = 0x8, scoped, tag = 'scoped memory for tpu_custom_call.1']
    #allocation6 [shape = 'u8[8192]{0}', space=vmem, size = 0x2000, scoped, tag = 'input window, operand 1, single buffered']
    #allocation7 [shape = 's32[1]{0}', space=sflag, size = 0x4, scoped, tag = 'scoped memory for tpu_custom_call.1']
    #allocation8 [shape = 'u8[8192]{0}', space=vmem, size = 0x2000, scoped, tag = 'input window, operand 2, single buffered']
    #allocation9 [shape = 'u8[8192]{0}', space=vmem, size = 0x2000, scoped, tag = 'output window, operand 0']
    #allocation10 [shape = 'u8[8192]{0}', space=vmem, size = 0x2000, scoped, tag = 'output window, operand 1']
    #allocation11 [shape = 's32[2]{0}', space=sflag, size = 0x8, scoped, tag = 'scoped memory for tpu_custom_call.1']
    %12 = vsyncpa [#allocation4], 0
    %s13 = scalar_lea.sflag [#allocation4], 1
    %14 = vsyncpa %s13, 0
    %15 = vsyncpa [#allocation7], 0
    %16 = vsyncpa [#allocation5], 0
    %s17 = scalar_lea.sflag [#allocation5], 1
    %18 = vsyncpa %s17, 0
    %19 = vsyncpa [#allocation11], 0
    %s20 = scalar_lea.sflag [#allocation11], 1
    %21 = vsyncpa %s20, 0
    loop: start=0, step=1, limit=4
    $region2: #{tpu_custom_call.1} parent=1 // loop_pre_header
      _
    $region3: #{tpu_custom_call.1} parent=1 // loop_header
      %s23 = sphi 0, %s27
      %p24 = scmp.ge.s32.totalorder %s23, 4
      %s30 = sphi 0, %s42
      %s31 = sphi 0, %s38
      %s32 = sphi 0, %s30
      %s33 = sphi 0, %s31
      %s34 = sphi 0, %s32
      %s35 = sphi 0, %s33
      %s45 = sphi 0, %s47
      %s48 = sphi 0, %s45
      %s49 = sphi 0, %s48
      %s65 = sphi 0, %s49
      %s69 = sphi 0, %s69
      %s71 = sphi 0, %s69
      %s72 = sphi 0, %s71
      %s86 = sphi 0, %s72
      %s90 = sphi 0, %s90
      %s92 = sphi 0, %s90
      %s93 = sphi 0, %s92
      %s107 = sphi 0, %s93
      %s111 = sphi 0, %s111
      %s113 = sphi 0, %s111
      %s114 = sphi 0, %s113
      %s128 = sphi 0, %s114
      %s132 = sphi 0, %s132
      %s134 = sphi 0, %s132
      %s135 = sphi 0, %s134
      %s149 = sphi 0, %s135
      %s157 = sphi 0, %s159
      %s160 = sphi 0, %s157
      %s161 = sphi 0, %s160
      %s177 = sphi 0, %s161
      %s185 = sphi 0, %s187
      %s188 = sphi 0, %s185
      %s189 = sphi 0, %s188
      %s205 = sphi 0, %s189
    $region4: #{tpu_custom_call.1} parent=1 // loop_header_branch
      %26 = sbr.rel (%p24) target = $region8
    $region5: #{tpu_custom_call.1} parent=1 // loop_body
      %s28 = ssub.s32 %s23, 1
      %s29 = ssub.s32 %s23, 2
      %s36 = sadd.s32 1, %s31
      %p37 = scmp.ge.s32.totalorder %s36, 1
      %s38 = scalar_select %p37, 0, %s36
      %s39 = sadd.s32 1, %s30
      %s40 = scalar_select %p37, %s39, %s30
      %p41 = scmp.ge.s32.totalorder %s40, 2
      %s42 = scalar_select %p41, 0, %s40
      %s43 = ssub.s32 %s30, %s42
      %p44 = scmp.eq.s32.totalorder %s43, 0
      %s46 = sadd.s32 %s45, 1
      %s47 = scalar_select %p44, %s45, %s46
      %p50 = pneg %p44
      %p51 = scmp.eq.s32.totalorder %s23, 1
      %p52 = por %p50, %p51
      %p53 = scmp.ne.s32.totalorder %s45, %s48
      %p54 = scmp.eq.s32.totalorder %s23, 0
      %p55 = por %p53, %p54
      %p56 = scmp.ne.s32.totalorder %s45, %s48
      %p57 = scmp.eq.s32.totalorder %s28, 1
      %p58 = por %p56, %p57
      %p59 = scmp.ne.s32.totalorder %s48, %s49
      %p60 = scmp.eq.s32.totalorder %s28, 0
      %p61 = por %p59, %p60
      %p62 = scmp.ne.s32.totalorder %s48, %s49
      %p63 = scmp.eq.s32.totalorder %s29, 1
      %p64 = por %p62, %p63
      %p66 = scmp.ne.s32.totalorder %s49, %s65
      %p67 = scmp.eq.s32.totalorder %s29, 0
      %p68 = por %p66, %p67
      %s70 = sadd.s32 %s69, 1
      %p73 = scmp.eq.s32.totalorder %s23, 1
      %p74 = scmp.ne.s32.totalorder %s69, %s71
      %p75 = scmp.eq.s32.totalorder %s23, 0
      %p76 = por %p74, %p75
      %p77 = scmp.ne.s32.totalorder %s69, %s71
      %p78 = scmp.eq.s32.totalorder %s28, 1
      %p79 = por %p77, %p78
      %p80 = scmp.ne.s32.totalorder %s71, %s72
      %p81 = scmp.eq.s32.totalorder %s28, 0
      %p82 = por %p80, %p81
      %p83 = scmp.ne.s32.totalorder %s71, %s72
      %p84 = scmp.eq.s32.totalorder %s29, 1
      %p85 = por %p83, %p84
      %p87 = scmp.ne.s32.totalorder %s72, %s86
      %p88 = scmp.eq.s32.totalorder %s29, 0
      %p89 = por %p87, %p88
      %s91 = sadd.s32 %s90, 1
      %p94 = scmp.eq.s32.totalorder %s23, 1
      %p95 = scmp.ne.s32.totalorder %s90, %s92
      %p96 = scmp.eq.s32.totalorder %s23, 0
      %p97 = por %p95, %p96
      %p98 = scmp.ne.s32.totalorder %s90, %s92
      %p99 = scmp.eq.s32.totalorder %s28, 1
      %p100 = por %p98, %p99
      %p101 = scmp.ne.s32.totalorder %s92, %s93
      %p102 = scmp.eq.s32.totalorder %s28, 0
      %p103 = por %p101, %p102
      %p104 = scmp.ne.s32.totalorder %s92, %s93
      %p105 = scmp.eq.s32.totalorder %s29, 1
      %p106 = por %p104, %p105
      %p108 = scmp.ne.s32.totalorder %s93, %s107
      %p109 = scmp.eq.s32.totalorder %s29, 0
      %p110 = por %p108, %p109
      %s112 = sadd.s32 %s111, 1
      %p115 = scmp.eq.s32.totalorder %s23, 1
      %p116 = scmp.ne.s32.totalorder %s111, %s113
      %p117 = scmp.eq.s32.totalorder %s23, 0
      %p118 = por %p116, %p117
      %p119 = scmp.ne.s32.totalorder %s111, %s113
      %p120 = scmp.eq.s32.totalorder %s28, 1
      %p121 = por %p119, %p120
      %p122 = scmp.ne.s32.totalorder %s113, %s114
      %p123 = scmp.eq.s32.totalorder %s28, 0
      %p124 = por %p122, %p123
      %p125 = scmp.ne.s32.totalorder %s113, %s114
      %p126 = scmp.eq.s32.totalorder %s29, 1
      %p127 = por %p125, %p126
      %p129 = scmp.ne.s32.totalorder %s114, %s128
      %p130 = scmp.eq.s32.totalorder %s29, 0
      %p131 = por %p129, %p130
      %s133 = sadd.s32 %s132, 1
      %p136 = scmp.eq.s32.totalorder %s23, 1
      %p137 = scmp.ne.s32.totalorder %s132, %s134
      %p138 = scmp.eq.s32.totalorder %s23, 0
      %p139 = por %p137, %p138
      %p140 = scmp.ne.s32.totalorder %s132, %s134
      %p141 = scmp.eq.s32.totalorder %s28, 1
      %p142 = por %p140, %p141
      %p143 = scmp.ne.s32.totalorder %s134, %s135
      %p144 = scmp.eq.s32.totalorder %s28, 0
      %p145 = por %p143, %p144
      %p146 = scmp.ne.s32.totalorder %s134, %s135
      %p147 = scmp.eq.s32.totalorder %s29, 1
      %p148 = por %p146, %p147
      %p150 = scmp.ne.s32.totalorder %s135, %s149
      %p151 = scmp.eq.s32.totalorder %s29, 0
      %p152 = por %p150, %p151
      %s153 = ssub.s32 %s30, %s42
      %s154 = ssub.s32 %s31, %s38
      %s155 = sor.u32 %s153, %s154
      %p156 = scmp.eq.s32.totalorder %s155, 0
      %s158 = sadd.s32 %s157, 1
      %s159 = scalar_select %p156, %s157, %s158
      %p162 = pneg %p156
      %p163 = scmp.eq.s32.totalorder %s23, 1
      %p164 = por %p162, %p163
      %p165 = scmp.ne.s32.totalorder %s157, %s160
      %p166 = scmp.eq.s32.totalorder %s23, 0
      %p167 = por %p165, %p166
      %p168 = scmp.ne.s32.totalorder %s157, %s160
      %p169 = scmp.eq.s32.totalorder %s28, 1
      %p170 = por %p168, %p169
      %p171 = scmp.ne.s32.totalorder %s160, %s161
      %p172 = scmp.eq.s32.totalorder %s28, 0
      %p173 = por %p171, %p172
      %p174 = scmp.ne.s32.totalorder %s160, %s161
      %p175 = scmp.eq.s32.totalorder %s29, 1
      %p176 = por %p174, %p175
      %p178 = scmp.ne.s32.totalorder %s161, %s177
      %p179 = scmp.eq.s32.totalorder %s29, 0
      %p180 = por %p178, %p179
      %s181 = ssub.s32 %s30, %s42
      %s182 = ssub.s32 %s31, %s38
      %s183 = sor.u32 %s181, %s182
      %p184 = scmp.eq.s32.totalorder %s183, 0
      %s186 = sadd.s32 %s185, 1
      %s187 = scalar_select %p184, %s185, %s186
      %p190 = pneg %p184
      %p191 = scmp.eq.s32.totalorder %s23, 1
      %p192 = por %p190, %p191
      %p193 = scmp.ne.s32.totalorder %s185, %s188
      %p194 = scmp.eq.s32.totalorder %s23, 0
      %p195 = por %p193, %p194
      %p196 = scmp.ne.s32.totalorder %s185, %s188
      %p197 = scmp.eq.s32.totalorder %s28, 1
      %p198 = por %p196, %p197
      %p199 = scmp.ne.s32.totalorder %s188, %s189
      %p200 = scmp.eq.s32.totalorder %s28, 0
      %p201 = por %p199, %p200
      %p202 = scmp.ne.s32.totalorder %s188, %s189
      %p203 = scmp.eq.s32.totalorder %s29, 1
      %p204 = por %p202, %p203
      %p206 = scmp.ne.s32.totalorder %s189, %s205
      %p207 = scmp.eq.s32.totalorder %s29, 0
      %p208 = por %p206, %p207
      %p209 = scmp.le.s32.totalorder 1, %s23
      %p210 = scmp.lt.s32.totalorder %s23, 3
      %p211 = pnand %p209, %p210
      %p212 = pneg %p211
      // Predicated region
      $region9: #{tpu_custom_call.1} parent=5 // pred_check
        _
      $region10: #{tpu_custom_call.1} parent=5 // pred_check_branch
        %214 = sbr.rel (%p211) target = $region12
      $region11: #{tpu_custom_call.1} parent=5 // pred_region
        %s215 = ssub.s32 %s23, 1
        // Predicated region
        $region13: #{tpu_custom_call.1} parent=11 // pred_check
          %p216 = pneg %p82
        $region14: #{tpu_custom_call.1} parent=11 // pred_check_branch
          %218 = sbr.rel (%p216) target = $region16
        $region15: #{tpu_custom_call.1} parent=11 // pred_region
          %s220 = ssub.s32 256, 256
          %221 = vsyncadd [#allocation7], %s220
          %s222 = sshll.u32 [#allocation6], 4
          %s223 = int_to_ptr.vmem [resolvable:$true] %s222
          %228 = dma.hbm_to_vmem [thread:$0]  %s1, 256, %s223, [#allocation7], 64, 64, 4
        $region16: #{tpu_custom_call.1} parent=11 // pred_fallthru
          _
        // Predicated region
        $region17: #{tpu_custom_call.1} parent=11 // pred_check
          %p229 = pneg %p103
        $region18: #{tpu_custom_call.1} parent=11 // pred_check_branch
          %231 = sbr.rel (%p229) target = $region20
        $region19: #{tpu_custom_call.1} parent=11 // pred_region
          %s233 = ssub.s32 256, 256
          %234 = vsyncadd [#allocation7], %s233
          %s235 = sshll.u32 [#allocation8], 4
          %s236 = int_to_ptr.vmem [resolvable:$true] %s235
          %241 = dma.hbm_to_vmem [thread:$0]  %s2, 256, %s236, [#allocation7], 64, 64, 4
        $region20: #{tpu_custom_call.1} parent=11 // pred_fallthru
          _
        // Predicated region
        $region21: #{tpu_custom_call.1} parent=11 // pred_check
          %p242 = pneg %p124
        $region22: #{tpu_custom_call.1} parent=11 // pred_check_branch
          %244 = sbr.rel (%p242) target = $region24
        $region23: #{tpu_custom_call.1} parent=11 // pred_region
          _
        $region24: #{tpu_custom_call.1} parent=11 // pred_fallthru
          _
        // Predicated region
        $region25: #{tpu_custom_call.1} parent=11 // pred_check
          %p245 = pneg %p145
        $region26: #{tpu_custom_call.1} parent=11 // pred_check_branch
          %247 = sbr.rel (%p245) target = $region28
        $region27: #{tpu_custom_call.1} parent=11 // pred_region
          _
        $region28: #{tpu_custom_call.1} parent=11 // pred_fallthru
          _
      $region12: #{tpu_custom_call.1} parent=5 // pred_fallthru
        _
      %p248 = scmp.lt.s32.totalorder %s23, 2
      // Predicated region
      $region29: #{tpu_custom_call.1} parent=5 // pred_check
        %p249 = pneg %p248
      $region30: #{tpu_custom_call.1} parent=5 // pred_check_branch
        %251 = sbr.rel (%p249) target = $region32
      $region31: #{tpu_custom_call.1} parent=5 // pred_region
        // Predicated region
        $region33: #{tpu_custom_call.1} parent=31 // pred_check
          %p252 = pneg %p55
        $region34: #{tpu_custom_call.1} parent=31 // pred_check_branch
          %254 = sbr.rel (%p252) target = $region36
        $region35: #{tpu_custom_call.1} parent=31 // pred_region
          %s255 = sand.u32 %s45, 1
          %s256 = scalar_lea.sflag [#allocation4], %s255
          %s257 = sand.u32 %s45, 1
          %s258 = smul.addr %s257, 8
          %s259 = scalar_lea.vmem [#allocation3], %s258
          %s261 = ssub.s32 128, 128
          %262 = vsyncadd %s256, %s261
          %s263 = smul.addr %s30, 128
          %s264 = scalar_lea.hbm %s0, %s263
          %s266 = sshll.u32 %s259, 4
          %s267 = int_to_ptr.vmem [resolvable:$true] %s266
          %269 = dma.hbm_to_vmem [thread:$0]  %s264, 128, %s267, %s256
        $region36: #{tpu_custom_call.1} parent=31 // pred_fallthru
          _
      $region32: #{tpu_custom_call.1} parent=5 // pred_fallthru
        _
      %p270 = scmp.le.s32.totalorder 1, %s23
      %p271 = scmp.lt.s32.totalorder %s23, 3
      %p272 = pnand %p270, %p271
      %p273 = pneg %p272
      // Predicated region
      $region37: #{tpu_custom_call.1} parent=5 // pred_check
        _
      $region38: #{tpu_custom_call.1} parent=5 // pred_check_branch
        %275 = sbr.rel (%p272) target = $region40
      $region39: #{tpu_custom_call.1} parent=5 // pred_region
        %s276 = ssub.s32 %s23, 1
        %s277 = sand.u32 %s48, 1
        %s278 = scalar_lea.sflag [#allocation4], %s277
        %s279 = sand.u32 %s48, 1
        %s280 = smul.addr %s279, 8
        %s281 = scalar_lea.vmem [#allocation3], %s280
        // Predicated region
        $region41: #{tpu_custom_call.1} parent=39 // pred_check
          %p282 = pneg %p61
        $region42: #{tpu_custom_call.1} parent=39 // pred_check_branch
          %284 = sbr.rel (%p282) target = $region44
        $region43: #{tpu_custom_call.1} parent=39 // pred_region
          %285 = dma.done %s278, 128
        $region44: #{tpu_custom_call.1} parent=39 // pred_fallthru
          _
        // Predicated region
        $region45: #{tpu_custom_call.1} parent=39 // pred_check
          %p286 = pneg %p82
        $region46: #{tpu_custom_call.1} parent=39 // pred_check_branch
          %288 = sbr.rel (%p286) target = $region48
        $region47: #{tpu_custom_call.1} parent=39 // pred_region
          %289 = dma.done [#allocation7], 256
        $region48: #{tpu_custom_call.1} parent=39 // pred_fallthru
          _
        // Predicated region
        $region49: #{tpu_custom_call.1} parent=39 // pred_check
          %p290 = pneg %p103
        $region50: #{tpu_custom_call.1} parent=39 // pred_check_branch
          %292 = sbr.rel (%p290) target = $region52
        $region51: #{tpu_custom_call.1} parent=39 // pred_region
          %293 = dma.done [#allocation7], 256
        $region52: #{tpu_custom_call.1} parent=39 // pred_fallthru
          _
        %s294 = sand.u32 %s48, 1
        %s295 = scalar_lea.sflag [#allocation4], %s294
        %s296 = sand.u32 %s48, 1
        %s297 = smul.addr %s296, 8
        %s298 = scalar_lea.vmem [#allocation3], %s297
        %p299 = pneg %p61
        %p300 = pneg %p58
        %p301 = pneg %p82
        %p302 = pneg %p79
        %p303 = pneg %p103
        %p304 = pneg %p100
        %p305 = pneg %p124
        %p306 = pneg %p121
        %p307 = pneg %p145
        %p308 = pneg %p142
        %p309 = pneg %p173
        %p310 = pneg %p170
        %s311 = sand.u32 %s160, 1
        %s312 = scalar_lea.sflag [#allocation5], %s311
        %s313 = sand.u32 %s160, 1
        %s314 = smul.addr %s313, 8
        %s315 = scalar_lea.vmem [#allocation9], %s314
        %p316 = pneg %p201
        %p317 = pneg %p198
        %s318 = sand.u32 %s188, 1
        %s319 = scalar_lea.sflag [#allocation11], %s318
        %s320 = sand.u32 %s188, 1
        %s321 = smul.addr %s320, 8
        %s322 = scalar_lea.vmem [#allocation10], %s321
        %p324 = scmp.eq.s32.totalorder %s33, 0
        // Predicated region
        $region53: #{tpu_custom_call.1} parent=39 // pred_check
          %p325 = pneg %p324
        $region54: #{tpu_custom_call.1} parent=39 // pred_check_branch
          %327 = sbr.rel (%p325) target = $region56
        $region55: #{tpu_custom_call.1} parent=39 // pred_region
          %v328 = vld [vmem:[%s281] sm:$0xff]
          %v329 = vpack.c.bf16 %v328, %v328
          %v330 = vld [vmem:[#allocation8] sm:$0xf]
          %v331 = vld [vmem:[#allocation8 + $0x4] sm:$0xf]
          %v332 = vld [vmem:[#allocation8 + $0x8] sm:$0xf]
          %v333 = vld [vmem:[#allocation8 + $0xc] sm:$0xf]
          %v334 = vld [vmem:[%s4] sm:$0x1]
          %v336 = vlaneseq
          %v337 = vshrl.u32 %v336, 7
          %v338 = vsub.s32 0, %v337
          %v339 = vrot.slane %v334, %v338
          %v345 = vunpack.c.l.b16 %v330
          %v346 = vunpack.c.l.b16 %v331
          %v347 = vunpack.c.l.b16 %v332
          %v348 = vunpack.c.l.b16 %v333
          %v349 = vpack.c.b16 %v346, %v345
          %v350 = vpack.c.b16 %v348, %v347
          %vm353 = vcmask 261120
          %v355 = vsel %vm353, %v329, 0
          %357 = vmatprep.subr.bf16.mxu0 0
          %358 = vmatpush1.bf16.msra.mxu0 0
          %359 = vmatprep.subr.bf16.mxu0 0
          %360 = vmatpush1.bf16.msra.mxu0 0
          %361 = vmatprep.subr.bf16.mxu0 0
          %362 = vmatpush1.bf16.msra.mxu0 0
          %363 = vmatprep.subr.bf16.mxu0 0
          %364 = vmatpush1.bf16.msra.mxu0 0
          %365 = vmatprep.subr.bf16.mxu0 0
          %366 = vmatpush1.bf16.msra.mxu0 0
          %367 = vmatprep.subr.bf16.mxu0 0
          %368 = vmatpush1.bf16.msra.mxu0 0
          %369 = vmatprep.subr.bf16.mxu0 0
          %370 = vmatpush1.bf16.msra.mxu0 %v350
          %371 = vmatprep.subr.bf16.mxu0 0
          %372 = vmatpush1.bf16.msra.mxu0 %v349
          %373 = vmatprep.subr.bf16.mxu0 0
          %374 = vmatpush2.bf16.msra.mxu0 0
          %375 = vmatprep.subr.bf16.mxu0 0
          %376 = vmatpush2.bf16.msra.mxu0 0
          %377 = vmatprep.subr.bf16.mxu0 0
          %378 = vmatpush2.bf16.msra.mxu0 0
          %379 = vmatprep.subr.bf16.mxu0 0
          %380 = vmatpush2.bf16.msra.mxu0 0
          %381 = vmatprep.subr.bf16.mxu0 0
          %382 = vmatpush2.bf16.msra.mxu0 0
          %383 = vmatprep.subr.bf16.mxu0 0
          %384 = vmatpush2.bf16.msra.mxu0 0
          %385 = vmatprep.subr.bf16.mxu0 0
          %386 = vmatpush2.bf16.msra.mxu0 0
          %387 = vmatprep.subr.bf16.mxu0 0
          %388 = vmatpush2.bf16.msra.mxu0 0
          %389 = vmatprep.mubr.bf16.mxu0 0
          %390 = vmatmul.mubr.bf16.gmra.mxu0 %v355
          %v391 = vpop.f32.mrf.mxu0
          %v392 = vadd.f32 %v339, %v391
          %v393 = vpop.f32.mrf.mxu0
          %v394 = vpop.f32.mrf.mxu0
          %v395 = vpop.f32.mrf.mxu0
          %396 = vdwg.mxu0
          %v397 = vpack.c.bf16 %v392, %v392
          %vm398 = vcmask 257024
          %399 = vst.msk [vmem:[#allocation2] sm:$0xf] %vm398, %v397
          %v401 = vunpack.c.l.b16 %v397
          %v402 = vpack.c.b16 %v401, %v401
          %403 = vrot.lane.b32.xlu0 %v402, 96
          %v404 = vpop.permute.xlu0 %403
          %s406 = scalar_lea.vmem [#allocation2], 4
          %407 = vst.msk [vmem:[%s406] sm:$0xf] %vm398, %v404
        $region56: #{tpu_custom_call.1} parent=39 // pred_fallthru
          _
        %s408 = smul.u32 %s33, 8
        %s409 = scalar_lea.vmem %s281, %s408 [#allocation3]
        %v410 = vld [vmem:[%s409] sm:$0xff]
        %v411 = vpack.c.bf16 %v410, %v410
        %v412 = vld [vmem:[#allocation6] sm:$0xf]
        %v413 = vld [vmem:[#allocation6 + $0x4] sm:$0xf]
        %v414 = vld [vmem:[#allocation6 + $0x8] sm:$0xf]
        %v415 = vld [vmem:[#allocation6 + $0xc] sm:$0xf]
        %v416 = vld [vmem:[%s3] sm:$0x1]
        %v418 = vlaneseq
        %v419 = vshrl.u32 %v418, 7
        %v420 = vsub.s32 0, %v419
        %v421 = vrot.slane %v416, %v420
        %v427 = vunpack.c.l.b16 %v412
        %v428 = vunpack.c.l.b16 %v413
        %v429 = vunpack.c.l.b16 %v414
        %v430 = vunpack.c.l.b16 %v415
        %v431 = vpack.c.b16 %v428, %v427
        %v432 = vpack.c.b16 %v430, %v429
        %vm435 = vcmask 261120
        %v437 = vsel %vm435, %v411, 0
        %439 = vmatprep.subr.bf16.mxu0 0
        %440 = vmatpush1.bf16.msra.mxu0 0
        %441 = vmatprep.subr.bf16.mxu0 0
        %442 = vmatpush1.bf16.msra.mxu0 0
        %443 = vmatprep.subr.bf16.mxu0 0
        %444 = vmatpush1.bf16.msra.mxu0 0
        %445 = vmatprep.subr.bf16.mxu0 0
        %446 = vmatpush1.bf16.msra.mxu0 0
        %447 = vmatprep.subr.bf16.mxu0 0
        %448 = vmatpush1.bf16.msra.mxu0 0
        %449 = vmatprep.subr.bf16.mxu0 0
        %450 = vmatpush1.bf16.msra.mxu0 0
        %451 = vmatprep.subr.bf16.mxu0 0
        %452 = vmatpush1.bf16.msra.mxu0 %v432
        %453 = vmatprep.subr.bf16.mxu0 0
        %454 = vmatpush1.bf16.msra.mxu0 %v431
        %455 = vmatprep.subr.bf16.mxu0 0
        %456 = vmatpush2.bf16.msra.mxu0 0
        %457 = vmatprep.subr.bf16.mxu0 0
        %458 = vmatpush2.bf16.msra.mxu0 0
        %459 = vmatprep.subr.bf16.mxu0 0
        %460 = vmatpush2.bf16.msra.mxu0 0
        %461 = vmatprep.subr.bf16.mxu0 0
        %462 = vmatpush2.bf16.msra.mxu0 0
        %463 = vmatprep.subr.bf16.mxu0 0
        %464 = vmatpush2.bf16.msra.mxu0 0
        %465 = vmatprep.subr.bf16.mxu0 0
        %466 = vmatpush2.bf16.msra.mxu0 0
        %467 = vmatprep.subr.bf16.mxu0 0
        %468 = vmatpush2.bf16.msra.mxu0 0
        %469 = vmatprep.subr.bf16.mxu0 0
        %470 = vmatpush2.bf16.msra.mxu0 0
        %471 = vmatprep.mubr.bf16.mxu0 0
        %472 = vmatmul.mubr.bf16.gmra.mxu0 %v437
        %v473 = vpop.f32.mrf.mxu0
        %v474 = vadd.f32 %v421, %v473
        %v475 = vpop.f32.mrf.mxu0
        %v476 = vpop.f32.mrf.mxu0
        %v477 = vpop.f32.mrf.mxu0
        %478 = vdwg.mxu0
        %v479 = vpack.c.bf16 %v474, %v474
        %v480 = vld [vmem:[#allocation2] sm:$0xf]
        %v482 = vsel %vm435, %v479, 0
        %v485 = vsel %vm435, %v480, 0
        %487 = vmatprep.subr.bf16.mxu0 0
        %488 = vmatpush1.bf16.xpose.msra.mxu0 0
        %489 = vmatprep.subr.bf16.mxu0 0
        %490 = vmatpush1.bf16.xpose.msra.mxu0 0
        %491 = vmatprep.subr.bf16.mxu0 0
        %492 = vmatpush1.bf16.xpose.msra.mxu0 0
        %493 = vmatprep.subr.bf16.mxu0 0
        %494 = vmatpush1.bf16.xpose.msra.mxu0 0
        %495 = vmatprep.subr.bf16.mxu0 0
        %496 = vmatpush1.bf16.xpose.msra.mxu0 0
        %497 = vmatprep.subr.bf16.mxu0 0
        %498 = vmatpush1.bf16.xpose.msra.mxu0 0
        %499 = vmatprep.subr.bf16.mxu0 0
        %500 = vmatpush1.bf16.xpose.msra.mxu0 0
        %501 = vmatprep.subr.bf16.mxu0 0
        %502 = vmatpush1.bf16.xpose.msra.mxu0 %v485
        %503 = vmatprep.subr.bf16.mxu0 0
        %504 = vmatpush2.bf16.xpose.msra.mxu0 0
        %505 = vmatprep.subr.bf16.mxu0 0
        %506 = vmatpush2.bf16.xpose.msra.mxu0 0
        %507 = vmatprep.subr.bf16.mxu0 0
        %508 = vmatpush2.bf16.xpose.msra.mxu0 0
        %509 = vmatprep.subr.bf16.mxu0 0
        %510 = vmatpush2.bf16.xpose.msra.mxu0 0
        %511 = vmatprep.subr.bf16.mxu0 0
        %512 = vmatpush2.bf16.xpose.msra.mxu0 0
        %513 = vmatprep.subr.bf16.mxu0 0
        %514 = vmatpush2.bf16.xpose.msra.mxu0 0
        %515 = vmatprep.subr.bf16.mxu0 0
        %516 = vmatpush2.bf16.xpose.msra.mxu0 0
        %517 = vmatprep.subr.bf16.mxu0 0
        %518 = vmatpush2.bf16.xpose.msra.mxu0 0
        %519 = vmatprep.mubr.bf16.mxu0 0
        %520 = vmatmul.mubr.bf16.gmra.mxu0 %v482
        %v521 = vpop.f32.mrf.mxu0
        %v522 = vadd.f32 0.0, %v521
        %v523 = vpop.f32.mrf.mxu0
        %v524 = vpop.f32.mrf.mxu0
        %v525 = vpop.f32.mrf.mxu0
        %526 = vdwg.mxu0
        %vm527 = vcmask 64512
        %v528 = vsel %vm527, %v522, -inf
        %529 = vmax.xlane.f32.xlu0 %v528
        %v530 = vpop.xlane.xlu0 %529
        %v531 = vsub.f32 %v522, %v530
        %v532 = vmul.f32 %v531, 1.442695
        %v533 = vpow.pop %v532
        %v534 = vsel %vm527, %v533, 0.0
        %535 = vadd.xlane.f32.xlu0 %v534
        %v536 = vpop.xlane.xlu0 %535
        %v537 = vrcp.pop %v536
        %v538 = vmul.f32 %v533, %v537
        %v539 = vpack.c.bf16 %v538, %v538
        %s540 = scalar_lea.vmem [#allocation2], 4
        %v541 = vld [vmem:[%s540] sm:$0xf]
        %v543 = vsel %vm527, %v539, 0
        %vm545 = vcmask 1043456
        %v547 = vsel %vm545, %v541, 0
        %549 = vmatprep.subr.bf16.mxu0 0
        %550 = vmatpush1.bf16.msra.mxu0 0
        %551 = vmatprep.subr.bf16.mxu0 0
        %552 = vmatpush1.bf16.msra.mxu0 0
        %553 = vmatprep.subr.bf16.mxu0 0
        %554 = vmatpush1.bf16.msra.mxu0 0
        %555 = vmatprep.subr.bf16.mxu0 0
        %556 = vmatpush1.bf16.msra.mxu0 0
        %557 = vmatprep.subr.bf16.mxu0 0
        %558 = vmatpush1.bf16.msra.mxu0 0
        %559 = vmatprep.subr.bf16.mxu0 0
        %560 = vmatpush1.bf16.msra.mxu0 0
        %561 = vmatprep.subr.bf16.mxu0 0
        %562 = vmatpush1.bf16.msra.mxu0 0
        %563 = vmatprep.subr.bf16.mxu0 0
        %564 = vmatpush1.bf16.msra.mxu0 %v547
        %565 = vmatprep.subr.bf16.mxu0 0
        %566 = vmatpush2.bf16.msra.mxu0 0
        %567 = vmatprep.subr.bf16.mxu0 0
        %568 = vmatpush2.bf16.msra.mxu0 0
        %569 = vmatprep.subr.bf16.mxu0 0
        %570 = vmatpush2.bf16.msra.mxu0 0
        %571 = vmatprep.subr.bf16.mxu0 0
        %572 = vmatpush2.bf16.msra.mxu0 0
        %573 = vmatprep.subr.bf16.mxu0 0
        %574 = vmatpush2.bf16.msra.mxu0 0
        %575 = vmatprep.subr.bf16.mxu0 0
        %576 = vmatpush2.bf16.msra.mxu0 0
        %577 = vmatprep.subr.bf16.mxu0 0
        %578 = vmatpush2.bf16.msra.mxu0 0
        %579 = vmatprep.subr.bf16.mxu0 0
        %580 = vmatpush2.bf16.msra.mxu0 0
        %581 = vmatprep.mubr.bf16.mxu0 0
        %582 = vmatmul.mubr.bf16.gmra.mxu0 %v543
        %v583 = vpop.f32.mrf.mxu0
        %v584 = vadd.f32 0.0, %v583
        %v585 = vpop.f32.mrf.mxu0
        %v586 = vpop.f32.mrf.mxu0
        %v587 = vpop.f32.mrf.mxu0
        %588 = vdwg.mxu0
        %589 = vst.msk [vmem:[%s315] sm:$0xff] %vm435, %v584
        %590 = vst.msk [vmem:[%s322] sm:$0xff] %vm527, %v538
        %s591 = sand.u32 %s160, 1
        %s592 = scalar_lea.sflag [#allocation5], %s591
        %s593 = sand.u32 %s160, 1
        %s594 = smul.addr %s593, 8
        %s595 = scalar_lea.vmem [#allocation9], %s594
        %s596 = sand.u32 %s188, 1
        %s597 = scalar_lea.sflag [#allocation11], %s596
        %s598 = sand.u32 %s188, 1
        %s599 = smul.addr %s598, 8
        %s600 = scalar_lea.vmem [#allocation10], %s599
        // Predicated region
        $region57: #{tpu_custom_call.1} parent=39 // pred_check
          %p601 = pneg %p170
        $region58: #{tpu_custom_call.1} parent=39 // pred_check_branch
          %603 = sbr.rel (%p601) target = $region60
        $region59: #{tpu_custom_call.1} parent=39 // pred_region
          %s605 = ssub.s32 128, 128
          %606 = vsyncadd %s592, %s605
          %s607 = sadd.s32 %s33, %s32
          %s608 = smul.addr %s607, 128
          %s609 = scalar_lea.hbm %s5, %s608
          %s611 = sshll.u32 %s595, 4
          %s612 = int_to_ptr.vmem [resolvable:$true] %s611
          %614 = dma.vmem_to_hbm [thread:$0]  %s612, 128, %s609, %s592
        $region60: #{tpu_custom_call.1} parent=39 // pred_fallthru
          _
        // Predicated region
        $region61: #{tpu_custom_call.1} parent=39 // pred_check
          %p615 = pneg %p198
        $region62: #{tpu_custom_call.1} parent=39 // pred_check_branch
          %617 = sbr.rel (%p615) target = $region64
        $region63: #{tpu_custom_call.1} parent=39 // pred_region
          %s619 = ssub.s32 128, 128
          %620 = vsyncadd %s597, %s619
          %s621 = sadd.s32 %s33, %s32
          %s622 = smul.addr %s621, 128
          %s623 = scalar_lea.hbm %s6, %s622
          %s625 = sshll.u32 %s600, 4
          %s626 = int_to_ptr.vmem [resolvable:$true] %s625
          %628 = dma.vmem_to_hbm [thread:$0]  %s626, 128, %s623, %s597
        $region64: #{tpu_custom_call.1} parent=39 // pred_fallthru
          _
      $region40: #{tpu_custom_call.1} parent=5 // pred_fallthru
        _
      %p629 = scmp.le.s32.totalorder 2, %s23
      // Predicated region
      $region65: #{tpu_custom_call.1} parent=5 // pred_check
        %p630 = pneg %p629
      $region66: #{tpu_custom_call.1} parent=5 // pred_check_branch
        %632 = sbr.rel (%p630) target = $region68
      $region67: #{tpu_custom_call.1} parent=5 // pred_region
        %s633 = ssub.s32 %s23, 2
        // Predicated region
        $region69: #{tpu_custom_call.1} parent=67 // pred_check
          %p634 = pneg %p176
        $region70: #{tpu_custom_call.1} parent=67 // pred_check_branch
          %636 = sbr.rel (%p634) target = $region72
        $region71: #{tpu_custom_call.1} parent=67 // pred_region
          %s637 = sand.u32 %s161, 1
          %s638 = scalar_lea.sflag [#allocation5], %s637
          %s639 = sand.u32 %s161, 1
          %s640 = smul.addr %s639, 8
          %s641 = scalar_lea.vmem [#allocation9], %s640
          %642 = dma.done %s638, 128
        $region72: #{tpu_custom_call.1} parent=67 // pred_fallthru
          _
        // Predicated region
        $region73: #{tpu_custom_call.1} parent=67 // pred_check
          %p643 = pneg %p204
        $region74: #{tpu_custom_call.1} parent=67 // pred_check_branch
          %645 = sbr.rel (%p643) target = $region76
        $region75: #{tpu_custom_call.1} parent=67 // pred_region
          %s646 = sand.u32 %s189, 1
          %s647 = scalar_lea.sflag [#allocation11], %s646
          %s648 = sand.u32 %s189, 1
          %s649 = smul.addr %s648, 8
          %s650 = scalar_lea.vmem [#allocation10], %s649
          %651 = dma.done %s647, 128
        $region76: #{tpu_custom_call.1} parent=67 // pred_fallthru
          _
      $region68: #{tpu_custom_call.1} parent=5 // pred_fallthru
        _
    $region6: #{tpu_custom_call.1} parent=1 // loop_footer
      %s27 = sadd.s32 1, %s23
    $region7: #{tpu_custom_call.1} parent=1 // loop_footer_branch
      %22 = sbr.rel target = $region3
    $region8: #{tpu_custom_call.1} parent=1 // loop_exit
      _
    %652 = vsyncpa [#allocation4], 1
    %s653 = scalar_lea.sflag [#allocation4], 1
    %654 = vsyncpa %s653, 1
    %655 = vsyncpa [#allocation7], 1
    %656 = vsyncpa [#allocation5], 1
    %s657 = scalar_lea.sflag [#allocation5], 1
    %658 = vsyncpa %s657, 1
    %659 = vsyncpa [#allocation11], 1
    %s660 = scalar_lea.sflag [#allocation11], 1
    %661 = vsyncpa %s660, 1

</llo_original>
